<compile_context>
chip_gen: v5e
topology: v5e:2x2
jax: 0.10.0
libtpu: 0.0.40
codegen_flags: <defaults>
</compile_context>

<pallas_src>
import numpy as np
import jax
import jax.numpy as jnp
from jax.experimental import pallas as pl
from jax.experimental.pallas import tpu as pltpu


# ---------------------------------------------------------------------------
# Host-side construction of the separable interpolation matrices.
# ---------------------------------------------------------------------------

def _cubic(x, a=-0.75):
    """PyTorch-style bicubic convolution kernel (a = -0.75)."""
    x = np.abs(np.asarray(x, dtype=np.float64))
    return np.where(
        x <= 1.0,
        (a + 2.0) * x ** 3 - (a + 3.0) * x ** 2 + 1.0,
        np.where(x < 2.0, a * x ** 3 - 5.0 * a * x ** 2 + 8.0 * a * x - 4.0 * a, 0.0),
    )


def _interp_matrix(out_size, crop_size, offset, full_size):
    """(out_size, full_size) matrix: crop [offset, offset+crop_size) of a
    length-`full_size` axis, then bicubic (align_corners=True) resize to
    `out_size`, with border-replicate tap clamping inside the crop."""
    W = np.zeros((out_size, full_size), dtype=np.float64)
    for i in range(out_size):
        src = 0.0 if out_size == 1 else i * (crop_size - 1) / (out_size - 1)
        f = int(np.floor(src))
        t = src - f
        for k in range(-1, 3):
            idx = min(max(f + k, 0), crop_size - 1)
            col = offset + idx
            if 0 <= col < full_size:
                W[i, col] += float(_cubic(k - t))
    return W.astype(np.float32)


def _build_geometry(cut_size, H, W, Overview, InnerCrop, IC_Size_Pow, IC_Grey_P,
                    seed):
    """Returns (Wy_all (G*cs, H), Wxt_all (G, W, cs), plan) where plan is the
    list of (geometry_index, apply_grayscale) in torch.cat order."""
    sideY, sideX = H, W
    max_size = min(sideX, sideY)
    min_size = min(sideX, sideY, cut_size)
    # F.pad(input, (pW, pW, pH, pH)): last dim (W) padded by (sideY-max)//2,
    # H padded by (sideX-max)//2.
    padW = (sideY - max_size) // 2
    padH = (sideX - max_size) // 2
    Hp, Wp = H + 2 * padH, W + 2 * padW

    wy_list, wxt_list, plan = [], [], []

    if Overview > 0:
        # Overview cutout: resize of the zero-padded image.  The pad is folded
        # into the matrices: build over the padded axis, keep only the columns
        # of the real image (pad columns would multiply zeros anyway).
        wy_ov = _interp_matrix(cut_size, Hp, 0, Hp)[:, padH:padH + H]
        wx_ov = _interp_matrix(cut_size, Wp, 0, Wp)[:, padW:padW + W]
        g_ov = len(wy_list)
        wy_list.append(wy_ov)
        wxt_list.append(wx_ov.T.copy())
        g_flip = None
        if 3 <= Overview <= 4:
            # hflip of the overview cutout == reversed output columns.
            g_flip = len(wy_list)
            wy_list.append(wy_ov)
            wxt_list.append(wx_ov[::-1].T.copy())
        if Overview <= 4:
            if Overview >= 1:
                plan.append((g_ov, False))
            if Overview >= 2:
                plan.append((g_ov, True))
            if Overview >= 3:
                plan.append((g_flip, False))
            if Overview == 4:
                plan.append((g_flip, True))
        else:
            plan.extend([(g_ov, False)] * Overview)

    if InnerCrop > 0:
        # TODO(synk): torch.rand / torch.randint cannot be reproduced here; a
        # seeded numpy RNG gives deterministic but different crop geometry.
        rng = np.random.RandomState(seed)
        for i in range(InnerCrop):
            size = int(float(rng.rand()) ** IC_Size_Pow * (max_size - min_size)
                       + min_size)
            size = max(1, min(size, max_size))
            offsetx = int(rng.randint(0, sideX - size + 1))
            offsety = int(rng.randint(0, sideY - size + 1))
            g = len(wy_list)
            wy_list.append(_interp_matrix(cut_size, size, offsety, H))
            wxt_list.append(_interp_matrix(cut_size, size, offsetx, W).T.copy())
            plan.append((g, i <= int(IC_Grey_P * InnerCrop)))

    if not wy_list:
        raise ValueError("Overview=0 and InnerCrop=0 produce no cutouts.")

    wy_all = np.concatenate(wy_list, axis=0)   # (G*cs, H)
    wxt_all = np.stack(wxt_list, axis=0)       # (G, W, cs)
    return wy_all, wxt_all, plan


# ---------------------------------------------------------------------------
# Pallas kernel: one plane per grid step -> one tall matmul + G small matmuls,
# stored as a single lane-dense (cs, G*cs) slab.
# ---------------------------------------------------------------------------

def _cutout_kernel(plane_ref, wy_ref, wxt_ref, out_ref):
    # plane_ref: (1, H, W)      bf16  -- one image plane per grid step
    # wy_ref   : (G*cs, H)      bf16  -- all cutout y-matrices, stacked (tall M)
    # wxt_ref  : (G, W, cs)     bf16  -- per-cutout x-matrices (transposed)
    # out_ref  : (1, cs, G*cs)  bf16  -- lane-dense slab, geometry g at g*cs
    G, _, cs = wxt_ref.shape
    plane = plane_ref[0]                                        # (H, W)
    # Tall first matmul: all G cutouts' y-interp at once (M = G*cs), f32 acc.
    t = jnp.dot(wy_ref[...], plane, preferred_element_type=jnp.float32)
    t = t.astype(jnp.bfloat16)                                  # bf16 MXU feed
    parts = []
    for g in range(G):                                          # G small, static
        tg = t[g * cs:(g + 1) * cs, :]                          # (cs, W) static
        parts.append(jnp.dot(tg, wxt_ref[g],
                             preferred_element_type=jnp.float32))
    # Single full-width store: unmasked vst when G*cs is a multiple of 128.
    out_ref[0] = jnp.concatenate(parts, axis=1).astype(out_ref.dtype)


def _run_cutout_kernel(planes, wy_all, wxt_all, cut_size):
    n_planes, H, W = planes.shape
    G = wxt_all.shape[0]
    GC = G * cut_size

    flops = 2 * n_planes * (GC * H * W + GC * cut_size * W)
    bytes_accessed = 2 * (planes.size + wy_all.size + wxt_all.size
                          + n_planes * cut_size * GC)           # bf16 everywhere

    return pl.pallas_call(
        _cutout_kernel,
        out_shape=jax.ShapeDtypeStruct((n_planes, cut_size, GC), jnp.bfloat16),
        grid=(n_planes,),
        in_specs=[
            # One plane per step: each plane is read from HBM exactly once.
            pl.BlockSpec((1, H, W), lambda i: (i, 0, 0)),
            # Weights: whole arrays, constant block index -> fetched once,
            # VMEM-resident for the entire kernel.
            pl.BlockSpec((GC, H), lambda i: (0, 0)),
            pl.BlockSpec((G, W, cut_size), lambda i: (0, 0, 0)),
        ],
        out_specs=pl.BlockSpec((1, cut_size, GC), lambda i: (i, 0, 0)),
        compiler_params=pltpu.CompilerParams(
            dimension_semantics=("parallel",),     # plane axis -> both v7x TCs
            vmem_limit_bytes=48 * 1024 * 1024,     # fits v5e/v6e/v7x physical
        ),
        cost_estimate=pl.CostEstimate(flops=flops, transcendentals=0,
                                      bytes_accessed=bytes_accessed),
    )(planes, wy_all, wxt_all)


# ---------------------------------------------------------------------------
# Wrapper: MakeCutoutsDango.forward (skip_augs semantics).
# ---------------------------------------------------------------------------

def _grayscale3(img):
    """torchvision Grayscale(3): luma mix replicated over 3 channels.
    Implemented with broadcast-multiply + sum (no mixed-precision dot)."""
    w = jnp.asarray([0.2989, 0.587, 0.114], dtype=img.dtype)
    y = (img * w[None, :, None, None]).sum(axis=1, keepdims=True)
    return jnp.repeat(y, img.shape[1], axis=1)


def _assemble(raw, plan, B, C, cut_size, out_dtype):
    # raw: (B*C, cs, G*cs) bf16 lane-dense slab -> (G, B, C, cs, cs) in f32,
    # then concatenate in the module's torch.cat order.
    G = raw.shape[-1] // cut_size
    raw = raw.astype(jnp.float32)
    raw = raw.reshape(B, C, cut_size, G, cut_size)
    raw = jnp.transpose(raw, (3, 0, 1, 2, 4))      # (G, B, C, cs, cs)
    pieces = []
    for g, do_gray in plan:
        cut = raw[g]
        if do_gray:
            cut = _grayscale3(cut)
        pieces.append(cut)
    return jnp.concatenate(pieces, axis=0).astype(out_dtype)


def _prepare_operands(x, cut_size, Overview, InnerCrop, IC_Size_Pow, IC_Grey_P,
                      seed):
    B, C, H, W = x.shape
    wy_np, wxt_np, plan = _build_geometry(cut_size, H, W, Overview, InnerCrop,
                                          IC_Size_Pow, IC_Grey_P, seed)
    if any(do_gray for _, do_gray in plan) and C != 3:
        raise ValueError("Grayscale(3) cutouts require a 3-channel input.")
    # bf16 operands halve the HBM->VMEM plane traffic; f32 accumulation in MXU.
    planes = x.reshape(B * C, H, W).astype(jnp.bfloat16)
    wy = jnp.asarray(wy_np, dtype=jnp.bfloat16)
    wxt = jnp.asarray(wxt_np, dtype=jnp.bfloat16)
    return planes, wy, wxt, plan, (B, C)


def make_cutouts_dango_pallas(x, cut_size, Overview=4, InnerCrop=0,
                              IC_Size_Pow=0.5, IC_Grey_P=0.2, skip_augs=True,
                              seed=0):
    """Pallas equivalent of MakeCutoutsDango.forward (skip_augs behavior)."""
    # TODO(synk): the torchvision augmentation pipeline used when
    # skip_augs=False (flip/affine/perspective/grayscale/jitter + noise) has no
    # clean Pallas equivalent; augmentations are skipped.
    # TODO(synk): resize_right's anti-alias prefilter is approximated by plain
    # bicubic (align_corners=True) interpolation matrices.
    planes, wy, wxt, plan, (B, C) = _prepare_operands(
        x, cut_size, Overview, InnerCrop, IC_Size_Pow, IC_Grey_P, seed)
    raw = _run_cutout_kernel(planes, wy, wxt, cut_size)
    return _assemble(raw, plan, B, C, cut_size, x.dtype)


def make_cutouts_dango_reference(x, cut_size, Overview=4, InnerCrop=0,
                                 IC_Size_Pow=0.5, IC_Grey_P=0.2, seed=0):
    """Pure-JAX reference of the same linearized path.

    All matmuls are done in f32 on upcast bf16 operands (bf16->f32 is exact,
    so this matches the MXU's bf16-input / f32-accumulate behavior) to avoid
    the unsupported BF16 x BF16 = F32 dot on non-TPU backends.  bf16 rounding
    is applied at the same points as the kernel."""
    planes, wy, wxt, plan, (B, C) = _prepare_operands(
        x, cut_size, Overview, InnerCrop, IC_Size_Pow, IC_Grey_P, seed)
    G = wxt.shape[0]
    n_planes = planes.shape[0]
    planes_f = planes.astype(jnp.float32)
    wy_f = wy.astype(jnp.float32)
    wxt_f = wxt.astype(jnp.float32)
    t = jnp.einsum('mh,phw->pmw', wy_f, planes_f)                   # f32 x f32
    t = t.astype(jnp.bfloat16).astype(jnp.float32)
    t = t.reshape(n_planes, G, cut_size, -1)
    raw = jnp.einsum('pgcw,gwx->pgcx', t, wxt_f)                    # f32 x f32
    raw = raw.astype(jnp.bfloat16)
    # Re-layout to the kernel's lane-dense slab (p, cs, G*cs).
    raw = jnp.transpose(raw, (0, 2, 1, 3)).reshape(n_planes, cut_size,
                                                   G * cut_size)
    return _assemble(raw, plan, B, C, cut_size, x.dtype)


if __name__ == "__main__":
    key = jax.random.PRNGKey(0)
    B, C, H, W = 2, 3, 16, 16
    cut_size = 8
    Overview, InnerCrop = 4, 2
    x = jax.random.normal(key, (B, C, H, W), dtype=jnp.float32)

    out = make_cutouts_dango_pallas(x, cut_size, Overview=Overview,
                                    InnerCrop=InnerCrop, skip_augs=True, seed=0)
    out = jax.block_until_ready(out)

    n_cut = 4 + InnerCrop   # Overview=4 -> 4 overview cutouts + InnerCrop
    assert out.shape == (n_cut * B, C, cut_size, cut_size), out.shape

    ref = make_cutouts_dango_reference(x, cut_size, Overview=Overview,
                                       InnerCrop=InnerCrop, seed=0)
    ref = jax.block_until_ready(ref)
    max_err = float(jnp.max(jnp.abs(out - ref)))
    # bf16 output rounding -> allow a few bf16 ulps of accumulation-order skew.
    assert jnp.allclose(out, ref, atol=3e-2, rtol=3e-2), max_err

    print("KERNEL_OK")
</pallas_src>

<mosaic_0001>
module attributes {stable_mosaic.version = 11 : i64} {
  func.func @_cutout_kernel(%arg0: i32, %arg1: memref<1x16x16xbf16, #tpu.memory_space<vmem>>, %arg2: memref<32x16xbf16, #tpu.memory_space<vmem>>, %arg3: memref<4x16x8xbf16, #tpu.memory_space<vmem>>, %arg4: memref<1x8x32xbf16, #tpu.memory_space<vmem>>) attributes {dimension_semantics = [#tpu.dimension_semantics<parallel>], iteration_bounds = array<i64: 6>, scalar_prefetch = 0 : i64, scratch_operands = 0 : i64, tpu.core_type = #tpu.core_type<tc>, window_params = [{transform_indices = @transform_0, window_bounds = array<i64: 1, 16, 16>}, {pipeline_mode = #tpu.pipeline_mode<synchronous>, transform_indices = @transform_1, window_bounds = array<i64: 32, 16>}, {pipeline_mode = #tpu.pipeline_mode<synchronous>, transform_indices = @transform_2, window_bounds = array<i64: 4, 16, 8>}, {transform_indices = @transform_3, window_bounds = array<i64: 1, 8, 32>}]} {
    %c0 = arith.constant 0 : index
    %c0_0 = arith.constant 0 : index
    %c0_1 = arith.constant 0 : index
    %0 = vector.load %arg1[%c0, %c0_0, %c0_1] : memref<1x16x16xbf16, #tpu.memory_space<vmem>>, vector<1x16x16xbf16>
    %1 = vector.shape_cast %0 : vector<1x16x16xbf16> to vector<16x16xbf16>
    %c0_2 = arith.constant 0 : index
    %c0_3 = arith.constant 0 : index
    %2 = vector.load %arg2[%c0_2, %c0_3] : memref<32x16xbf16, #tpu.memory_space<vmem>>, vector<32x16xbf16>
    %cst = arith.constant dense<0.000000e+00> : vector<32x16xf32>
    %3 = tpu.matmul %2, %1, %cst {dimension_numbers = #tpu.dot_dimension_numbers<[1], [0], [0], [1], [0, 0, 1, 1], [], []>} : vector<32x16xbf16>, vector<16x16xbf16>, vector<32x16xf32> -> vector<32x16xf32>
    %4 = arith.truncf %3 : vector<32x16xf32> to vector<32x16xbf16>
    %5 = vector.extract_strided_slice %4 {offsets = [0, 0], sizes = [8, 16], strides = [1, 1]} : vector<32x16xbf16> to vector<8x16xbf16>
    %c0_4 = arith.constant 0 : index
    %c0_5 = arith.constant 0 : index
    %c0_6 = arith.constant 0 : index
    %6 = vector.load %arg3[%c0_4, %c0_5, %c0_6] : memref<4x16x8xbf16, #tpu.memory_space<vmem>>, vector<1x16x8xbf16>
    %7 = vector.shape_cast %6 : vector<1x16x8xbf16> to vector<16x8xbf16>
    %cst_7 = arith.constant dense<0.000000e+00> : vector<8x8xf32>
    %8 = tpu.matmul %5, %7, %cst_7 {dimension_numbers = #tpu.dot_dimension_numbers<[1], [0], [0], [1], [0, 0, 1, 1], [], []>} : vector<8x16xbf16>, vector<16x8xbf16>, vector<8x8xf32> -> vector<8x8xf32>
    %9 = vector.extract_strided_slice %4 {offsets = [8, 0], sizes = [8, 16], strides = [1, 1]} : vector<32x16xbf16> to vector<8x16xbf16>
    %c1 = arith.constant 1 : index
    %c0_8 = arith.constant 0 : index
    %c0_9 = arith.constant 0 : index
    %10 = vector.load %arg3[%c1, %c0_8, %c0_9] : memref<4x16x8xbf16, #tpu.memory_space<vmem>>, vector<1x16x8xbf16>
    %11 = vector.shape_cast %10 : vector<1x16x8xbf16> to vector<16x8xbf16>
    %cst_10 = arith.constant dense<0.000000e+00> : vector<8x8xf32>
    %12 = tpu.matmul %9, %11, %cst_10 {dimension_numbers = #tpu.dot_dimension_numbers<[1], [0], [0], [1], [0, 0, 1, 1], [], []>} : vector<8x16xbf16>, vector<16x8xbf16>, vector<8x8xf32> -> vector<8x8xf32>
    %13 = vector.extract_strided_slice %4 {offsets = [16, 0], sizes = [8, 16], strides = [1, 1]} : vector<32x16xbf16> to vector<8x16xbf16>
    %c2 = arith.constant 2 : index
    %c0_11 = arith.constant 0 : index
    %c0_12 = arith.constant 0 : index
    %14 = vector.load %arg3[%c2, %c0_11, %c0_12] : memref<4x16x8xbf16, #tpu.memory_space<vmem>>, vector<1x16x8xbf16>
    %15 = vector.shape_cast %14 : vector<1x16x8xbf16> to vector<16x8xbf16>
    %cst_13 = arith.constant dense<0.000000e+00> : vector<8x8xf32>
    %16 = tpu.matmul %13, %15, %cst_13 {dimension_numbers = #tpu.dot_dimension_numbers<[1], [0], [0], [1], [0, 0, 1, 1], [], []>} : vector<8x16xbf16>, vector<16x8xbf16>, vector<8x8xf32> -> vector<8x8xf32>
    %17 = vector.extract_strided_slice %4 {offsets = [24, 0], sizes = [8, 16], strides = [1, 1]} : vector<32x16xbf16> to vector<8x16xbf16>
    %c3 = arith.constant 3 : index
    %c0_14 = arith.constant 0 : index
    %c0_15 = arith.constant 0 : index
    %18 = vector.load %arg3[%c3, %c0_14, %c0_15] : memref<4x16x8xbf16, #tpu.memory_space<vmem>>, vector<1x16x8xbf16>
    %19 = vector.shape_cast %18 : vector<1x16x8xbf16> to vector<16x8xbf16>
    %cst_16 = arith.constant dense<0.000000e+00> : vector<8x8xf32>
    %20 = tpu.matmul %17, %19, %cst_16 {dimension_numbers = #tpu.dot_dimension_numbers<[1], [0], [0], [1], [0, 0, 1, 1], [], []>} : vector<8x16xbf16>, vector<16x8xbf16>, vector<8x8xf32> -> vector<8x8xf32>
    %21 = tpu.concatenate %8, %12, %16, %20 in 1 : vector<8x8xf32>, vector<8x8xf32>, vector<8x8xf32>, vector<8x8xf32> -> vector<8x32xf32>
    %22 = arith.truncf %21 : vector<8x32xf32> to vector<8x32xbf16>
    %c0_17 = arith.constant 0 : index
    %c0_18 = arith.constant 0 : index
    %c0_19 = arith.constant 0 : index
    %23 = vector.load %arg4[%c0_17, %c0_18, %c0_19] : memref<1x8x32xbf16, #tpu.memory_space<vmem>>, vector<1x8x32xbf16>
    %24 = vector.shape_cast %23 : vector<1x8x32xbf16> to vector<8x32xbf16>
    %25 = vector.shape_cast %22 : vector<8x32xbf16> to vector<1x8x32xbf16>
    tpu.vector_store %arg4[%c0_17, %c0_18, %c0_19], %25 {strides = array<i32>} : memref<1x8x32xbf16, #tpu.memory_space<vmem>>, vector<1x8x32xbf16>,
    return
  }
  func.func @transform_0(%arg0: i32) -> (i32, i32, i32) {
    %c0_i32 = arith.constant 0 : i32
    %c0_i32_0 = arith.constant 0 : i32
    %c0_i32_1 = arith.constant 0 : i32
    return %arg0, %c0_i32, %c0_i32_0 : i32, i32, i32
  }
  func.func @transform_1(%arg0: i32) -> (i32, i32) {
    %c0_i32 = arith.constant 0 : i32
    %c0_i32_0 = arith.constant 0 : i32
    %c0_i32_1 = arith.constant 0 : i32
    return %c0_i32, %c0_i32_0 : i32, i32
  }
  func.func @transform_2(%arg0: i32) -> (i32, i32, i32) {
    %c0_i32 = arith.constant 0 : i32
    %c0_i32_0 = arith.constant 0 : i32
    %c0_i32_1 = arith.constant 0 : i32
    %c0_i32_2 = arith.constant 0 : i32
    return %c0_i32, %c0_i32_0, %c0_i32_1 : i32, i32, i32
  }
  func.func @transform_3(%arg0: i32) -> (i32, i32, i32) {
    %c0_i32 = arith.constant 0 : i32
    %c0_i32_0 = arith.constant 0 : i32
    %c0_i32_1 = arith.constant 0 : i32
    return %arg0, %c0_i32, %c0_i32_0 : i32, i32, i32
  }
}

</mosaic_0001>

<llo_original>
// kernel: tpu_custom_call.1
$region0: #{tpu_custom_call.1}
  #allocation0 [shape = 'u32[]', space=smem, size = 0x4, offset = 0x4, fixed_abs, tag = 'smem constant byte address 0x4 - core index']
  #allocation1 [shape = 'u32[72,128]{1,0:T(1,128)}', space=vmem, size = 0x9000, scoped, tag = 'internal scratch']
  %s0 = inlined_call_operand.vmem [shape: bf16[6,16,16], index: 0, kind: input, shape index: {}]
  %s1 = inlined_call_operand.vmem [shape: bf16[32,16], index: 1, kind: input, shape index: {}]
  %s2 = inlined_call_operand.vmem [shape: bf16[4,16,8], index: 2, kind: input, shape index: {}]
  %s3 = inlined_call_operand.hbm [shape: bf16[6,8,32], index: 3, kind: output, shape index: {}]
  %s4 = sld [smem:[#allocation0]]
  $region45: #{tpu_custom_call.1} parent=0
    _
  %s6 = ssub.s32 1, %s4
  %s7 = scalar_select 0, %s6, %s4
  $region1: #{tpu_custom_call.1} parent=0
    #allocation2 [shape = 'u8[4096]{0}', space=vmem, size = 0x1000, scoped, tag = 'output window, operand 0']
    #allocation3 [shape = 's32[2]{0}', space=sflag, size = 0x8, scoped, tag = 'scoped memory for tpu_custom_call.1']
    %8 = vsyncpa [#allocation3], 0
    %s9 = scalar_lea.sflag [#allocation3], 1
    %10 = vsyncpa %s9, 0
    loop: start=0, step=1, limit=8
    $region2: #{tpu_custom_call.1} parent=1 // loop_pre_header
      _
    $region3: #{tpu_custom_call.1} parent=1 // loop_header
      %s12 = sphi 0, %s16
      %p13 = scmp.ge.s32.totalorder %s12, 8
      %s22 = sphi 0, %s24
      %s25 = sphi 0, %s22
      %s26 = sphi 0, %s25
      %s42 = sphi 0, %s26
      %s46 = sphi 0, %s46
      %s48 = sphi 0, %s46
      %s49 = sphi 0, %s48
      %s63 = sphi 0, %s49
      %s67 = sphi 0, %s67
      %s69 = sphi 0, %s67
      %s70 = sphi 0, %s69
      %s84 = sphi 0, %s70
      %s90 = sphi 0, %s92
      %s93 = sphi 0, %s90
      %s94 = sphi 0, %s93
      %s110 = sphi 0, %s94
    $region4: #{tpu_custom_call.1} parent=1 // loop_header_branch
      %15 = sbr.rel (%p13) target = $region8
    $region5: #{tpu_custom_call.1} parent=1 // loop_body
      %s17 = ssub.s32 %s12, 1
      %s18 = ssub.s32 %s12, 2
      %s19 = sadd.s32 %s12, 1
      %s20 = ssub.s32 %s12, %s19
      %p21 = scmp.eq.s32.totalorder %s20, 0
      %s23 = sadd.s32 %s22, 1
      %s24 = scalar_select %p21, %s22, %s23
      %p27 = pneg %p21
      %p28 = scmp.eq.s32.totalorder %s12, 5
      %p29 = por %p27, %p28
      %p30 = scmp.ne.s32.totalorder %s22, %s25
      %p31 = scmp.eq.s32.totalorder %s12, 0
      %p32 = por %p30, %p31
      %p33 = scmp.ne.s32.totalorder %s22, %s25
      %p34 = scmp.eq.s32.totalorder %s17, 5
      %p35 = por %p33, %p34
      %p36 = scmp.ne.s32.totalorder %s25, %s26
      %p37 = scmp.eq.s32.totalorder %s17, 0
      %p38 = por %p36, %p37
      %p39 = scmp.ne.s32.totalorder %s25, %s26
      %p40 = scmp.eq.s32.totalorder %s18, 5
      %p41 = por %p39, %p40
      %p43 = scmp.ne.s32.totalorder %s26, %s42
      %p44 = scmp.eq.s32.totalorder %s18, 0
      %p45 = por %p43, %p44
      %s47 = sadd.s32 %s46, 1
      %p50 = scmp.eq.s32.totalorder %s12, 5
      %p51 = scmp.ne.s32.totalorder %s46, %s48
      %p52 = scmp.eq.s32.totalorder %s12, 0
      %p53 = por %p51, %p52
      %p54 = scmp.ne.s32.totalorder %s46, %s48
      %p55 = scmp.eq.s32.totalorder %s17, 5
      %p56 = por %p54, %p55
      %p57 = scmp.ne.s32.totalorder %s48, %s49
      %p58 = scmp.eq.s32.totalorder %s17, 0
      %p59 = por %p57, %p58
      %p60 = scmp.ne.s32.totalorder %s48, %s49
      %p61 = scmp.eq.s32.totalorder %s18, 5
      %p62 = por %p60, %p61
      %p64 = scmp.ne.s32.totalorder %s49, %s63
      %p65 = scmp.eq.s32.totalorder %s18, 0
      %p66 = por %p64, %p65
      %s68 = sadd.s32 %s67, 1
      %p71 = scmp.eq.s32.totalorder %s12, 5
      %p72 = scmp.ne.s32.totalorder %s67, %s69
      %p73 = scmp.eq.s32.totalorder %s12, 0
      %p74 = por %p72, %p73
      %p75 = scmp.ne.s32.totalorder %s67, %s69
      %p76 = scmp.eq.s32.totalorder %s17, 5
      %p77 = por %p75, %p76
      %p78 = scmp.ne.s32.totalorder %s69, %s70
      %p79 = scmp.eq.s32.totalorder %s17, 0
      %p80 = por %p78, %p79
      %p81 = scmp.ne.s32.totalorder %s69, %s70
      %p82 = scmp.eq.s32.totalorder %s18, 5
      %p83 = por %p81, %p82
      %p85 = scmp.ne.s32.totalorder %s70, %s84
      %p86 = scmp.eq.s32.totalorder %s18, 0
      %p87 = por %p85, %p86
      %s88 = ssub.s32 %s12, %s19
      %p89 = scmp.eq.s32.totalorder %s88, 0
      %s91 = sadd.s32 %s90, 1
      %s92 = scalar_select %p89, %s90, %s91
      %p95 = pneg %p89
      %p96 = scmp.eq.s32.totalorder %s12, 5
      %p97 = por %p95, %p96
      %p98 = scmp.ne.s32.totalorder %s90, %s93
      %p99 = scmp.eq.s32.totalorder %s12, 0
      %p100 = por %p98, %p99
      %p101 = scmp.ne.s32.totalorder %s90, %s93
      %p102 = scmp.eq.s32.totalorder %s17, 5
      %p103 = por %p101, %p102
      %p104 = scmp.ne.s32.totalorder %s93, %s94
      %p105 = scmp.eq.s32.totalorder %s17, 0
      %p106 = por %p104, %p105
      %p107 = scmp.ne.s32.totalorder %s93, %s94
      %p108 = scmp.eq.s32.totalorder %s18, 5
      %p109 = por %p107, %p108
      %p111 = scmp.ne.s32.totalorder %s94, %s110
      %p112 = scmp.eq.s32.totalorder %s18, 0
      %p113 = por %p111, %p112
      %p114 = scmp.le.s32.totalorder 1, %s12
      %p115 = scmp.lt.s32.totalorder %s12, 7
      %p116 = pnand %p114, %p115
      %p117 = pneg %p116
      // Predicated region
      $region9: #{tpu_custom_call.1} parent=5 // pred_check
        _
      $region10: #{tpu_custom_call.1} parent=5 // pred_check_branch
        %119 = sbr.rel (%p116) target = $region12
      $region11: #{tpu_custom_call.1} parent=5 // pred_region
        %s120 = ssub.s32 %s12, 1
        // Predicated region
        $region13: #{tpu_custom_call.1} parent=11 // pred_check
          %p121 = pneg %p59
        $region14: #{tpu_custom_call.1} parent=11 // pred_check_branch
          %123 = sbr.rel (%p121) target = $region16
        $region15: #{tpu_custom_call.1} parent=11 // pred_region
          _
        $region16: #{tpu_custom_call.1} parent=11 // pred_fallthru
          _
        // Predicated region
        $region17: #{tpu_custom_call.1} parent=11 // pred_check
          %p124 = pneg %p80
        $region18: #{tpu_custom_call.1} parent=11 // pred_check_branch
          %126 = sbr.rel (%p124) target = $region20
        $region19: #{tpu_custom_call.1} parent=11 // pred_region
          _
        $region20: #{tpu_custom_call.1} parent=11 // pred_fallthru
          _
      $region12: #{tpu_custom_call.1} parent=5 // pred_fallthru
        _
      %p127 = scmp.lt.s32.totalorder %s12, 6
      // Predicated region
      $region21: #{tpu_custom_call.1} parent=5 // pred_check
        %p128 = pneg %p127
      $region22: #{tpu_custom_call.1} parent=5 // pred_check_branch
        %130 = sbr.rel (%p128) target = $region24
      $region23: #{tpu_custom_call.1} parent=5 // pred_region
        // Predicated region
        $region25: #{tpu_custom_call.1} parent=23 // pred_check
          %p131 = pneg %p32
        $region26: #{tpu_custom_call.1} parent=23 // pred_check_branch
          %133 = sbr.rel (%p131) target = $region28
        $region27: #{tpu_custom_call.1} parent=23 // pred_region
          %p134 = scmp.lt.s32.totalorder %s12, 5
          %s135 = scalar_select %p134, %s12, 5
          %s136 = smul.addr %s135, 2
          %s137 = smul.addr %s136, 4
          %s138 = scalar_lea.vmem %s0, %s137
        $region28: #{tpu_custom_call.1} parent=23 // pred_fallthru
          _
      $region24: #{tpu_custom_call.1} parent=5 // pred_fallthru
        _
      %p139 = scmp.le.s32.totalorder 1, %s12
      %p140 = scmp.lt.s32.totalorder %s12, 7
      %p141 = pnand %p139, %p140
      %p142 = pneg %p141
      // Predicated region
      $region29: #{tpu_custom_call.1} parent=5 // pred_check
        _
      $region30: #{tpu_custom_call.1} parent=5 // pred_check_branch
        %144 = sbr.rel (%p141) target = $region32
      $region31: #{tpu_custom_call.1} parent=5 // pred_region
        %s145 = ssub.s32 %s12, 1
        %p146 = scmp.lt.s32.totalorder %s17, 5
        %s147 = scalar_select %p146, %s17, 5
        %s148 = smul.addr %s147, 2
        %s149 = smul.addr %s148, 4
        %s150 = scalar_lea.vmem %s0, %s149
        %p151 = pneg %p38
        %p152 = pneg %p35
        %p153 = pneg %p59
        %p154 = pneg %p56
        %p155 = pneg %p80
        %p156 = pneg %p77
        %p157 = pneg %p106
        %p158 = pneg %p103
        %s159 = sand.u32 %s93, 1
        %s160 = scalar_lea.sflag [#allocation3], %s159
        %s161 = sand.u32 %s93, 1
        %s162 = smul.addr %s161, 4
        %s163 = scalar_lea.vmem [#allocation2], %s162
        %p164 = scmp.lt.s32.totalorder %s17, 5
        %s165 = scalar_select %p164, %s17, 5
        %s166 = smul.addr %s165, 2
        %s167 = smul.addr %s166, 4
        %s168 = scalar_lea.vmem %s0, %s167
        %v170 = vld [vmem:[%s168] sm:$0xf]
        %v171 = vld [vmem:[%s168 + $0x4] sm:$0xf]
        %v172 = vld [vmem:[%s1] sm:$0xf]
        %v173 = vld [vmem:[%s1 + $0x4] sm:$0xf]
        %v174 = vld [vmem:[%s1 + $0x8] sm:$0xf]
        %v175 = vld [vmem:[%s1 + $0xc] sm:$0xf]
        %v180 = vunpack.c.l.b16 %v172
        %v181 = vunpack.c.l.b16 %v173
        %v182 = vunpack.c.l.b16 %v174
        %v183 = vunpack.c.l.b16 %v175
        %v184 = vpack.c.b16 %v181, %v180
        %v185 = vpack.c.b16 %v183, %v182
        %v188 = vunpack.c.l.b16 %v170
        %v189 = vunpack.c.l.b16 %v171
        %v190 = vpack.c.b16 %v189, %v188
        %vm192 = vcmask 130048
        %v194 = vsel %vm192, %v184, 0
        %v197 = vsel %vm192, %v185, 0
        %199 = vmatpush.bf16.msra.mxu0 0
        %200 = vmatpush.bf16.msra.mxu0 0
        %201 = vmatpush.bf16.msra.mxu0 0
        %202 = vmatpush.bf16.msra.mxu0 0
        %203 = vmatpush.bf16.msra.mxu0 0
        %204 = vmatpush.bf16.msra.mxu0 0
        %205 = vmatpush.bf16.msra.mxu0 0
        %206 = vmatpush.bf16.msra.mxu0 %v190
        %207 = vmatmul.bf16.gmra.mxu0 %v194
        %v208 = vpop.f32.mrf.mxu0
        %v209 = vadd.f32 0.0, %v208
        %v210 = vpop.f32.mrf.mxu0
        %v211 = vadd.f32 0.0, %v210
        %212 = vmatmul.bf16.gmra.mxu0 %v197
        %v213 = vpop.f32.mrf.mxu0
        %v214 = vadd.f32 0.0, %v213
        %v215 = vpop.f32.mrf.mxu0
        %v216 = vadd.f32 0.0, %v215
        %217 = vdwg.mxu0
        %v218 = vpack.c.bf16 %v209, %v209
        %v219 = vpack.c.bf16 %v211, %v211
        %v220 = vpack.c.bf16 %v214, %v214
        %v221 = vpack.c.bf16 %v216, %v216
        %v222 = vld [vmem:[%s2] sm:$0xf]
        %v223 = vld [vmem:[%s2 + $0x4] sm:$0xf]
        %v226 = vunpack.c.l.b16 %v222
        %v227 = vunpack.c.l.b16 %v223
        %v228 = vpack.c.b16 %v227, %v226
        %v231 = vsel %vm192, %v218, 0
        %233 = vmatpush.bf16.msra.mxu0 0
        %234 = vmatpush.bf16.msra.mxu0 0
        %235 = vmatpush.bf16.msra.mxu0 0
        %236 = vmatpush.bf16.msra.mxu0 0
        %237 = vmatpush.bf16.msra.mxu0 0
        %238 = vmatpush.bf16.msra.mxu0 0
        %239 = vmatpush.bf16.msra.mxu0 0
        %240 = vmatpush.bf16.msra.mxu0 %v228
        %241 = vmatmul.bf16.gmra.mxu0 %v231
        %v242 = vpop.f32.mrf.mxu0
        %v243 = vadd.f32 0.0, %v242
        %v244 = vpop.f32.mrf.mxu0
        %245 = vdwg.mxu0
        %s246 = scalar_lea.vmem %s2, 8
        %v247 = vld [vmem:[%s246] sm:$0xf]
        %v248 = vld [vmem:[%s246 + $0x4] sm:$0xf]
        %v251 = vunpack.c.l.b16 %v247
        %v252 = vunpack.c.l.b16 %v248
        %v253 = vpack.c.b16 %v252, %v251
        %v256 = vsel %vm192, %v219, 0
        %258 = vmatpush.bf16.msra.mxu0 0
        %259 = vmatpush.bf16.msra.mxu0 0
        %260 = vmatpush.bf16.msra.mxu0 0
        %261 = vmatpush.bf16.msra.mxu0 0
        %262 = vmatpush.bf16.msra.mxu0 0
        %263 = vmatpush.bf16.msra.mxu0 0
        %264 = vmatpush.bf16.msra.mxu0 0
        %265 = vmatpush.bf16.msra.mxu0 %v253
        %266 = vmatmul.bf16.gmra.mxu0 %v256
        %v267 = vpop.f32.mrf.mxu0
        %v268 = vadd.f32 0.0, %v267
        %v269 = vpop.f32.mrf.mxu0
        %270 = vdwg.mxu0
        %s271 = scalar_lea.vmem %s2, 16
        %v272 = vld [vmem:[%s271] sm:$0xf]
        %v273 = vld [vmem:[%s271 + $0x4] sm:$0xf]
        %v276 = vunpack.c.l.b16 %v272
        %v277 = vunpack.c.l.b16 %v273
        %v278 = vpack.c.b16 %v277, %v276
        %v281 = vsel %vm192, %v220, 0
        %283 = vmatpush.bf16.msra.mxu0 0
        %284 = vmatpush.bf16.msra.mxu0 0
        %285 = vmatpush.bf16.msra.mxu0 0
        %286 = vmatpush.bf16.msra.mxu0 0
        %287 = vmatpush.bf16.msra.mxu0 0
        %288 = vmatpush.bf16.msra.mxu0 0
        %289 = vmatpush.bf16.msra.mxu0 0
        %290 = vmatpush.bf16.msra.mxu0 %v278
        %291 = vmatmul.bf16.gmra.mxu0 %v281
        %v292 = vpop.f32.mrf.mxu0
        %v293 = vadd.f32 0.0, %v292
        %v294 = vpop.f32.mrf.mxu0
        %295 = vdwg.mxu0
        %s296 = scalar_lea.vmem %s2, 24
        %v297 = vld [vmem:[%s296] sm:$0xf]
        %v298 = vld [vmem:[%s296 + $0x4] sm:$0xf]
        %v301 = vunpack.c.l.b16 %v297
        %v302 = vunpack.c.l.b16 %v298
        %v303 = vpack.c.b16 %v302, %v301
        %v306 = vsel %vm192, %v221, 0
        %308 = vmatpush.bf16.msra.mxu0 0
        %309 = vmatpush.bf16.msra.mxu0 0
        %310 = vmatpush.bf16.msra.mxu0 0
        %311 = vmatpush.bf16.msra.mxu0 0
        %312 = vmatpush.bf16.msra.mxu0 0
        %313 = vmatpush.bf16.msra.mxu0 0
        %314 = vmatpush.bf16.msra.mxu0 0
        %315 = vmatpush.bf16.msra.mxu0 %v303
        %316 = vmatmul.bf16.gmra.mxu0 %v306
        %v317 = vpop.f32.mrf.mxu0
        %v318 = vadd.f32 0.0, %v317
        %v319 = vpop.f32.mrf.mxu0
        %320 = vdwg.mxu0
        %322 = vrot.lane.b32.xlu0 %v268, 8
        %v323 = vpop.permute.xlu0 %322
        %326 = vrot.lane.b32.xlu0 %v293, 16
        %v327 = vpop.permute.xlu0 %326
        %330 = vrot.lane.b32.xlu0 %v318, 24
        %v331 = vpop.permute.xlu0 %330
        %vm333 = vcmask 64512
        %v334 = vsel %vm333, %v243, %v323
        %v335 = vsel %vm192, %v334, %v327
        %vm336 = vcmask 195584
        %v337 = vsel %vm336, %v335, %v331
        %v338 = vpack.c.bf16 %v337, %v337
        %vm339 = vcmask 257024
        %340 = vst.msk [vmem:[%s163] sm:$0xf] %vm339, %v338
        %s341 = sand.u32 %s93, 1
        %s342 = scalar_lea.sflag [#allocation3], %s341
        %s343 = sand.u32 %s93, 1
        %s344 = smul.addr %s343, 4
        %s345 = scalar_lea.vmem [#allocation2], %s344
        // Predicated region
        $region33: #{tpu_custom_call.1} parent=31 // pred_check
          %p346 = pneg %p103
        $region34: #{tpu_custom_call.1} parent=31 // pred_check_branch
          %348 = sbr.rel (%p346) target = $region36
        $region35: #{tpu_custom_call.1} parent=31 // pred_region
          %350 = vsyncadd %s342, 0
          %s351 = smul.addr %s17, 4
          %s352 = scalar_lea.hbm %s3, %s351
          %s354 = sshll.u32 %s345, 4
          %s355 = int_to_ptr.vmem [resolvable:$true] %s354
          %s356 = sshll.u32 %s352, 4
          %s357 = int_to_ptr.hbm [resolvable:$true] %s356
          %359 = dma.vmem_to_hbm [thread:$0]  %s355, 64, %s357, %s342
        $region36: #{tpu_custom_call.1} parent=31 // pred_fallthru
          _
      $region32: #{tpu_custom_call.1} parent=5 // pred_fallthru
        _
      %p360 = scmp.le.s32.totalorder 2, %s12
      // Predicated region
      $region37: #{tpu_custom_call.1} parent=5 // pred_check
        %p361 = pneg %p360
      $region38: #{tpu_custom_call.1} parent=5 // pred_check_branch
        %363 = sbr.rel (%p361) target = $region40
      $region39: #{tpu_custom_call.1} parent=5 // pred_region
        %s364 = ssub.s32 %s12, 2
        // Predicated region
        $region41: #{tpu_custom_call.1} parent=39 // pred_check
          %p365 = pneg %p109
        $region42: #{tpu_custom_call.1} parent=39 // pred_check_branch
          %367 = sbr.rel (%p365) target = $region44
        $region43: #{tpu_custom_call.1} parent=39 // pred_region
          %s368 = sand.u32 %s94, 1
          %s369 = scalar_lea.sflag [#allocation3], %s368
          %s370 = sand.u32 %s94, 1
          %s371 = smul.addr %s370, 4
          %s372 = scalar_lea.vmem [#allocation2], %s371
          %374 = dma.done %s369, 64
        $region44: #{tpu_custom_call.1} parent=39 // pred_fallthru
          _
      $region40: #{tpu_custom_call.1} parent=5 // pred_fallthru
        _
    $region6: #{tpu_custom_call.1} parent=1 // loop_footer
      %s16 = sadd.s32 1, %s12
    $region7: #{tpu_custom_call.1} parent=1 // loop_footer_branch
      %11 = sbr.rel target = $region3
    $region8: #{tpu_custom_call.1} parent=1 // loop_exit
      _
    %375 = vsyncpa [#allocation3], 1
    %s376 = scalar_lea.sflag [#allocation3], 1
    %377 = vsyncpa %s376, 1

</llo_original>
